<compile_context>
chip_gen: v6e
topology: v6e:2x2x1
jax: 0.10.0
libtpu: 0.0.40
codegen_flags: <defaults>
</compile_context>

<pallas_src>
import math

import jax
import jax.numpy as jnp
from jax.experimental import pallas as pl
from jax.experimental.pallas import tpu as pltpu


def _round_up(x: int, m: int) -> int:
    return ((x + m - 1) // m) * m


def _cdiv(a: int, b: int) -> int:
    return (a + b - 1) // b


def _vmem_budget_bytes() -> int:
    """~75% of per-TensorCore VMEM: ≈48 MiB on v7x, ≈96 MiB on v5e/v6e."""
    try:
        cap = pltpu.get_tpu_info().vmem_capacity_bytes
    except Exception:
        cap = 64 * 1024 * 1024  # conservative fallback (v7x: 64 MiB / TC)
    return max(32 * 1024 * 1024, (cap * 3) // 4)


# ----------------------------------------------------------------------------
# Kernels
# ----------------------------------------------------------------------------
def _linear_kernel_single_k(x_ref, w_ref, b_ref, o_ref):
    # One K step: no accumulator scratch, no pl.when phases.  Bias added in f32.
    acc = jnp.dot(x_ref[...], w_ref[...], preferred_element_type=jnp.float32)
    o_ref[...] = (acc + b_ref[...].astype(jnp.float32)).astype(o_ref.dtype)


def _linear_kernel_multi_k(x_ref, w_ref, b_ref, o_ref, acc_ref):
    k = pl.program_id(2)

    @pl.when(k == 0)
    def _():
        acc_ref[...] = jnp.zeros_like(acc_ref)

    # Canonical (tm,tk)@(tk,tn) — weight already in (K, N) layout, no transpose.
    acc_ref[...] += jnp.dot(x_ref[...], w_ref[...],
                            preferred_element_type=jnp.float32)

    @pl.when(k == pl.num_programs(2) - 1)
    def _():
        o_ref[...] = (acc_ref[...] + b_ref[...].astype(jnp.float32)
                      ).astype(o_ref.dtype)


# ----------------------------------------------------------------------------
# Wrapper with init-time parameter preparation (pad / transpose / cast once)
# ----------------------------------------------------------------------------
class PallasLinear:
    """y = x @ W^T + b, W given in PyTorch (out_dim, in_dim) layout."""

    def __init__(self, weight, bias, *, compute_dtype=None, out_dtype=None):
        out_dim, in_dim = weight.shape
        self.in_dim = int(in_dim)
        self.out_dim = int(out_dim)
        self.out_dtype = out_dtype

        self.operand_dtype = (jnp.dtype(compute_dtype) if compute_dtype is not None
                              else jnp.dtype(weight.dtype))
        self.operand_bytes = self.operand_dtype.itemsize
        # sublane packing: f32 -> 8 rows / vreg, bf16 -> 16, int8/fp8 -> 32
        self.sublane = max(8, 32 // self.operand_bytes)

        self.vmem_budget = _vmem_budget_bytes()

        # ---- K tiling (fixed at init; the padded weight matches it) --------
        tk_cap = 1024
        k128 = _round_up(self.in_dim, 128)
        if k128 <= tk_cap:
            # Single K step.  tk == in_dim means a block dim equal to the full
            # array dim -> legal layout AND x never needs per-call K padding.
            self.tk = self.in_dim
            self.k_pad = self.in_dim
        else:
            # TODO(synk): for K not a multiple of tk, pick a divisor-friendly tk
            # instead of padding K (typical transformer dims divide cleanly).
            self.tk = tk_cap
            self.k_pad = _round_up(self.in_dim, self.tk)

        # ---- N tiling (lane-dense output stores) ----------------------------
        n128 = _round_up(self.out_dim, 128)
        best_tn, best_pad = 128, _round_up(self.out_dim, 128)
        for cand in (512, 384, 256, 128):
            npad = _round_up(self.out_dim, cand)
            if npad < best_pad or (npad == best_pad and cand > best_tn):
                best_tn, best_pad = cand, npad
        self.tn = min(best_tn, n128)
        self.n_pad = _round_up(self.out_dim, self.tn)

        # ---- Prepare parameters ONCE ----------------------------------------
        w = weight
        if (self.out_dim, self.in_dim) != (self.n_pad, self.k_pad):
            w = jnp.pad(w, ((0, self.n_pad - self.out_dim),
                            (0, self.k_pad - self.in_dim)))
        # (out,in) -> (in,out): canonical MXU layout, cast to compute dtype here
        # so HBM traffic and VMEM tiles are already narrow (no in-kernel casts).
        self.w_kn = jnp.asarray(w.T, dtype=self.operand_dtype)      # (K_pad, N_pad)

        b = bias.reshape(1, self.out_dim).astype(jnp.float32)
        if self.out_dim != self.n_pad:
            b = jnp.pad(b, ((0, 0), (0, self.n_pad - self.out_dim)))
        self.b2d = b                                                  # (1, N_pad) f32

    def __call__(self, x):
        if x.shape[-1] != self.in_dim:
            raise ValueError(f"expected last dim {self.in_dim}, got {x.shape[-1]}")
        lead = x.shape[:-1]
        M = int(math.prod(lead)) if lead else 1
        out_dtype = jnp.dtype(self.out_dtype) if self.out_dtype is not None else x.dtype

        # Cast once in the wrapper (ideally the producer already emits this
        # dtype, making it a no-op).
        x2d = x.reshape(M, self.in_dim).astype(self.operand_dtype)

        # ---- M tiling --------------------------------------------------------
        sub = self.sublane
        # Operand reuse: W is streamed ceil(M/tm) times -> for long-sequence
        # M >> N grow tm first.
        tm_cap = 1024 if M >= 4 * self.n_pad else 512
        tm = min(tm_cap, _round_up(M, sub))
        m_pad = _round_up(M, tm)

        # ---- v7x megacore: ensure >= 2 blocks on a parallel axis ------------
        tn = self.tn
        if _cdiv(m_pad, tm) * _cdiv(self.n_pad, tn) < 2:
            if self.n_pad >= 256:
                for g in range(2, self.n_pad // 128 + 1):
                    if self.n_pad % g == 0 and (self.n_pad // g) % 128 == 0:
                        tn = self.n_pad // g
                        break
            elif m_pad >= 256:
                tm = max(sub, _round_up(_cdiv(m_pad, 2), sub))
                m_pad = _round_up(M, tm)

        # ---- keep the working set inside the per-generation VMEM budget -----
        def footprint(tm_, tn_, tk_):
            in_b = 2 * (tm_ * tk_ + tk_ * tn_) * self.operand_bytes + 2 * tn_ * 4
            out_b = 2 * tm_ * tn_ * jnp.dtype(out_dtype).itemsize
            acc_b = tm_ * tn_ * 4
            return in_b + out_b + acc_b

        while footprint(tm, tn, self.tk) > self.vmem_budget and tm > sub:
            tm = max(sub, _round_up(tm // 2, sub))
        m_pad = _round_up(M, tm)

        # x only padded when a dim genuinely needs it (no-op for aligned dims).
        if (m_pad, self.k_pad) != (M, self.in_dim):
            x2d = jnp.pad(x2d, ((0, m_pad - M), (0, self.k_pad - self.in_dim)))

        gm = m_pad // tm
        gn = self.n_pad // tn
        gk = self.k_pad // self.tk

        # Advisory cost: actual streamed bytes (re-streaming included).
        x_bytes = m_pad * self.k_pad * self.operand_bytes
        w_bytes = self.k_pad * self.n_pad * self.operand_bytes
        o_bytes = m_pad * self.n_pad * jnp.dtype(out_dtype).itemsize
        cost = pl.CostEstimate(
            flops=2 * m_pad * self.k_pad * self.n_pad,
            transcendentals=0,
            bytes_accessed=x_bytes * gn + w_bytes * gm + o_bytes,
        )

        if gk == 1:
            kernel = _linear_kernel_single_k
            grid = (gm, gn)
            in_specs = [
                pl.BlockSpec((tm, self.tk), lambda i, j: (i, 0)),   # x
                pl.BlockSpec((self.tk, tn), lambda i, j: (0, j)),   # W (K,N)
                pl.BlockSpec((1, tn), lambda i, j: (0, j)),         # bias
            ]
            out_spec = pl.BlockSpec((tm, tn), lambda i, j: (i, j))
            scratch = []
            dims = ("parallel", "parallel")
        else:
            kernel = _linear_kernel_multi_k
            grid = (gm, gn, gk)
            in_specs = [
                pl.BlockSpec((tm, self.tk), lambda i, j, k: (i, k)),  # x
                pl.BlockSpec((self.tk, tn), lambda i, j, k: (k, j)),  # W (K,N)
                pl.BlockSpec((1, tn), lambda i, j, k: (0, j)),        # bias
            ]
            out_spec = pl.BlockSpec((tm, tn), lambda i, j, k: (i, j))
            scratch = [pltpu.VMEM((tm, tn), jnp.float32)]
            dims = ("parallel", "parallel", "arbitrary")

        out2d = pl.pallas_call(
            kernel,
            out_shape=jax.ShapeDtypeStruct((m_pad, self.n_pad), out_dtype),
            grid_spec=pltpu.PrefetchScalarGridSpec(
                num_scalar_prefetch=0,
                grid=grid,
                in_specs=in_specs,
                out_specs=out_spec,
                scratch_shapes=scratch,
            ),
            compiler_params=pltpu.CompilerParams(
                dimension_semantics=dims,
                vmem_limit_bytes=self.vmem_budget,
            ),
            cost_estimate=cost,
        )(x2d, self.w_kn, self.b2d)

        if (m_pad, self.n_pad) != (M, self.out_dim):
            out2d = out2d[:M, :self.out_dim]
        return out2d.reshape(*lead, self.out_dim)


if __name__ == "__main__":
    key = jax.random.PRNGKey(0)
    k1, k2, k3, k4, k5, k6 = jax.random.split(key, 6)

    # --- Test 1: module config FakeTransformer(input_dim=32, hidden_dim=64,
    # output_dim=16).  hidden_dim is unused by the forward pass (only self.fc).
    input_dim, hidden_dim, output_dim = 32, 64, 16
    batch, seq = 2, 8

    bound = 1.0 / (input_dim ** 0.5)
    weight = jax.random.uniform(k1, (output_dim, input_dim), jnp.float32, -bound, bound)
    bias = jax.random.uniform(k2, (output_dim,), jnp.float32, -bound, bound)
    x = jax.random.normal(k3, (batch, seq, input_dim), jnp.float32)

    ref = jnp.dot(x, weight.T, precision=jax.lax.Precision.HIGHEST) + bias

    # f32 operands: single-K-step fast path, no x padding, exact vs reference.
    out_f32 = jax.block_until_ready(PallasLinear(weight, bias)(x))
    assert out_f32.shape == (batch, seq, output_dim)
    assert jnp.allclose(out_f32, ref, atol=1e-5, rtol=1e-5)

    # bf16-in-HBM operands / f32 accumulation (byte-reduction path; loose tol).
    out_bf16 = jax.block_until_ready(
        PallasLinear(weight, bias, compute_dtype=jnp.bfloat16)(x)
    )
    assert out_bf16.shape == (batch, seq, output_dim)
    assert jnp.allclose(out_bf16, ref, atol=3e-2, rtol=3e-2)

    # --- Test 2: exercise the multi-K accumulator path and the megacore N
    # split (K=1536 > tk_cap -> 3-D grid; N=256 -> tn split to 128, 2 blocks).
    in2, out2 = 1536, 256
    b2 = 1.0 / (in2 ** 0.5)
    w2 = jax.random.uniform(k4, (out2, in2), jnp.float32, -b2, b2)
    bb2 = jax.random.uniform(k5, (out2,), jnp.float32, -b2, b2)
    x2 = jax.random.normal(k6, (4, 16, in2), jnp.float32)
    ref2 = jnp.dot(x2, w2.T, precision=jax.lax.Precision.HIGHEST) + bb2

    out_big = jax.block_until_ready(PallasLinear(w2, bb2)(x2))
    assert out_big.shape == (4, 16, out2)
    assert jnp.allclose(out_big, ref2, atol=1e-3, rtol=1e-3)

    print("KERNEL_OK")
</pallas_src>

<mosaic_0001>
module attributes {stable_mosaic.version = 11 : i64} {
  func.func @_linear_kernel_single_k(%arg0: i32, %arg1: i32, %arg2: memref<16x32xf32, #tpu.memory_space<vmem>>, %arg3: memref<32x128xf32, #tpu.memory_space<vmem>>, %arg4: memref<1x128xf32, #tpu.memory_space<vmem>>, %arg5: memref<16x128xf32, #tpu.memory_space<vmem>>) attributes {dimension_semantics = [#tpu.dimension_semantics<parallel>, #tpu.dimension_semantics<parallel>], iteration_bounds = array<i64: 1, 1>, scalar_prefetch = 0 : i64, scratch_operands = 0 : i64, tpu.core_type = #tpu.core_type<tc>, window_params = [{transform_indices = @transform_0, window_bounds = array<i64: 16, 32>}, {transform_indices = @transform_1, window_bounds = array<i64: 32, 128>}, {transform_indices = @transform_2, window_bounds = array<i64: 1, 128>}, {transform_indices = @transform_3, window_bounds = array<i64: 16, 128>}]} {
    %c0 = arith.constant 0 : index
    %c0_0 = arith.constant 0 : index
    %0 = vector.load %arg2[%c0, %c0_0] : memref<16x32xf32, #tpu.memory_space<vmem>>, vector<16x32xf32>
    %c0_1 = arith.constant 0 : index
    %c0_2 = arith.constant 0 : index
    %1 = vector.load %arg3[%c0_1, %c0_2] : memref<32x128xf32, #tpu.memory_space<vmem>>, vector<32x128xf32>
    %cst = arith.constant dense<0.000000e+00> : vector<16x128xf32>
    %2 = tpu.matmul %0, %1, %cst {dimension_numbers = #tpu.dot_dimension_numbers<[1], [0], [0], [1], [0, 0, 1, 1], [], []>} : vector<16x32xf32>, vector<32x128xf32>, vector<16x128xf32> -> vector<16x128xf32>
    %c0_3 = arith.constant 0 : index
    %c0_4 = arith.constant 0 : index
    %3 = vector.load %arg4[%c0_3, %c0_4] : memref<1x128xf32, #tpu.memory_space<vmem>>, vector<1x128xf32>
    %4 = vector.broadcast %3 : vector<1x128xf32> to vector<16x128xf32>
    %5 = arith.addf %2, %4 : vector<16x128xf32>
    %c0_5 = arith.constant 0 : index
    %c0_6 = arith.constant 0 : index
    %6 = vector.load %arg5[%c0_5, %c0_6] : memref<16x128xf32, #tpu.memory_space<vmem>>, vector<16x128xf32>
    tpu.vector_store %arg5[%c0_5, %c0_6], %5 {strides = array<i32>} : memref<16x128xf32, #tpu.memory_space<vmem>>, vector<16x128xf32>,
    return
  }
  func.func @transform_0(%arg0: i32, %arg1: i32) -> (i32, i32) {
    %c0_i32 = arith.constant 0 : i32
    %c0_i32_0 = arith.constant 0 : i32
    return %arg0, %c0_i32 : i32, i32
  }
  func.func @transform_1(%arg0: i32, %arg1: i32) -> (i32, i32) {
    %c0_i32 = arith.constant 0 : i32
    %c0_i32_0 = arith.constant 0 : i32
    return %c0_i32, %arg1 : i32, i32
  }
  func.func @transform_2(%arg0: i32, %arg1: i32) -> (i32, i32) {
    %c0_i32 = arith.constant 0 : i32
    %c0_i32_0 = arith.constant 0 : i32
    return %c0_i32, %arg1 : i32, i32
  }
  func.func @transform_3(%arg0: i32, %arg1: i32) -> (i32, i32) {
    %c0_i32 = arith.constant 0 : i32
    return %arg0, %arg1 : i32, i32
  }
}

</mosaic_0001>

<llo_original>
// kernel: tpu_custom_call.1
$region0: #{tpu_custom_call.1}
  #allocation0 [shape = 'u32[]', space=smem, size = 0x4, offset = 0x4, fixed_abs, tag = 'smem constant byte address 0x4 - core index']
  #allocation1 [shape = 'u32[144,128]{1,0:T(1,128)}', space=vmem, size = 0x12000, scoped, tag = 'internal scratch']
  %s0 = inlined_call_operand.hbm [shape: f32[16,32], index: 0, kind: input, shape index: {}]
  %s1 = inlined_call_operand.hbm [shape: f32[32,128], index: 1, kind: input, shape index: {}]
  %s2 = inlined_call_operand.vmem [shape: f32[1,128], index: 2, kind: input, shape index: {}]
  %s3 = inlined_call_operand.hbm [shape: f32[16,128], index: 3, kind: output, shape index: {}]
  %s4 = sld [smem:[#allocation0]]
  $region30: #{tpu_custom_call.1} parent=0
    _
  %s6 = ssub.s32 1, %s4
  %s7 = scalar_select 0, %s6, %s4
  $region1: #{tpu_custom_call.1} parent=0
    #allocation2 [shape = 'u8[8192]{0}', space=vmem, size = 0x2000, scoped, tag = 'input window, operand 0, single buffered']
    #allocation3 [shape = 's32[1]{0}', space=sflag, size = 0x4, scoped, tag = 'scoped memory for tpu_custom_call.1']
    #allocation4 [shape = 's32[1]{0}', space=sflag, size = 0x4, scoped, tag = 'scoped memory for tpu_custom_call.1']
    #allocation5 [shape = 'u8[16384]{0}', space=vmem, size = 0x4000, scoped, tag = 'input window, operand 1, single buffered']
    #allocation6 [shape = 's32[1]{0}', space=sflag, size = 0x4, scoped, tag = 'scoped memory for tpu_custom_call.1']
    #allocation7 [shape = 'u8[8192]{0}', space=vmem, size = 0x2000, scoped, tag = 'output window, operand 0, single buffered']
    %8 = vsyncpa [#allocation3], 0
    %9 = vsyncpa [#allocation6], 0
    %10 = vsyncpa [#allocation4], 0
    // Predicated region
    $region2: #{tpu_custom_call.1} parent=1 // pred_check
      _
    $region3: #{tpu_custom_call.1} parent=1 // pred_check_branch
      %12 = sbr.rel (0) target = $region5
    $region4: #{tpu_custom_call.1} parent=1 // pred_region
      %s14 = ssub.s32 256, 256
      %15 = vsyncadd [#allocation3], %s14
      %s16 = sshll.u32 [#allocation2], 4
      %s17 = int_to_ptr.vmem [resolvable:$true] %s16
      %22 = dma.hbm_to_vmem [thread:$0]  %s0, 256, %s17, [#allocation3], 128, 128, 8
    $region5: #{tpu_custom_call.1} parent=1 // pred_fallthru
      _
    // Predicated region
    $region6: #{tpu_custom_call.1} parent=1 // pred_check
      _
    $region7: #{tpu_custom_call.1} parent=1 // pred_check_branch
      %24 = sbr.rel (0) target = $region9
    $region8: #{tpu_custom_call.1} parent=1 // pred_region
      %s26 = ssub.s32 512, 512
      %27 = vsyncadd [#allocation6], %s26
      %s28 = sshll.u32 [#allocation5], 4
      %s29 = int_to_ptr.vmem [resolvable:$true] %s28
      %34 = dma.hbm_to_vmem [thread:$0]  %s1, 512, %s29, [#allocation6], 128, 128, 8
    $region9: #{tpu_custom_call.1} parent=1 // pred_fallthru
      _
    // Predicated region
    $region10: #{tpu_custom_call.1} parent=1 // pred_check
      _
    $region11: #{tpu_custom_call.1} parent=1 // pred_check_branch
      %36 = sbr.rel (0) target = $region13
    $region12: #{tpu_custom_call.1} parent=1 // pred_region
      _
    $region13: #{tpu_custom_call.1} parent=1 // pred_fallthru
      _
    // Predicated region
    $region14: #{tpu_custom_call.1} parent=1 // pred_check
      _
    $region15: #{tpu_custom_call.1} parent=1 // pred_check_branch
      %38 = sbr.rel (0) target = $region17
    $region16: #{tpu_custom_call.1} parent=1 // pred_region
      %39 = dma.done [#allocation3], 256
    $region17: #{tpu_custom_call.1} parent=1 // pred_fallthru
      _
    // Predicated region
    $region18: #{tpu_custom_call.1} parent=1 // pred_check
      _
    $region19: #{tpu_custom_call.1} parent=1 // pred_check_branch
      %41 = sbr.rel (0) target = $region21
    $region20: #{tpu_custom_call.1} parent=1 // pred_region
      %42 = dma.done [#allocation6], 512
    $region21: #{tpu_custom_call.1} parent=1 // pred_fallthru
      _
    %v43 = vld [vmem:[#allocation2] sm:$0xff]
    %v44 = vld [vmem:[#allocation2 + $0x8] sm:$0xff]
    %v45 = vld [vmem:[#allocation5] sm:$0xff]
    %v46 = vld [vmem:[#allocation5 + $0x8] sm:$0xff]
    %v47 = vld [vmem:[#allocation5 + $0x10] sm:$0xff]
    %v48 = vld [vmem:[#allocation5 + $0x18] sm:$0xff]
    %v49 = vld [vmem:[%s2] sm:$0x1]
    %v51 = vlaneseq
    %v52 = vshrl.u32 %v51, 7
    %v53 = vsub.s32 0, %v52
    %v54 = vrot.slane %v49, %v53
    %vm56 = vcmask 261120
    %v58 = vsel %vm56, %v43, 0
    %v61 = vsel %vm56, %v44, 0
    %63 = vmatprep.subr.mxu0 0.0
    %64 = vmatpush1.msra.mxu0 0.0
    %65 = vmatprep.subr.mxu0 0.0
    %66 = vmatpush1.msra.mxu0 0.0
    %67 = vmatprep.subr.mxu0 0.0
    %68 = vmatpush1.msra.mxu0 0.0
    %69 = vmatprep.subr.mxu0 0.0
    %70 = vmatpush1.msra.mxu0 0.0
    %71 = vmatprep.subr.mxu0 0.0
    %72 = vmatpush1.msra.mxu0 0.0
    %73 = vmatprep.subr.mxu0 0.0
    %74 = vmatpush1.msra.mxu0 0.0
    %75 = vmatprep.subr.mxu0 0.0
    %76 = vmatpush1.msra.mxu0 0.0
    %77 = vmatprep.subr.mxu0 0.0
    %78 = vmatpush1.msra.mxu0 0.0
    %79 = vmatprep.subr.mxu0 0.0
    %80 = vmatpush1.msra.mxu0 0.0
    %81 = vmatprep.subr.mxu0 0.0
    %82 = vmatpush1.msra.mxu0 0.0
    %83 = vmatprep.subr.mxu0 0.0
    %84 = vmatpush1.msra.mxu0 0.0
    %85 = vmatprep.subr.mxu0 0.0
    %86 = vmatpush1.msra.mxu0 0.0
    %87 = vmatprep.subr.mxu0 0.0
    %88 = vmatpush1.msra.mxu0 %v48
    %89 = vmatprep.subr.mxu0 0.0
    %90 = vmatpush1.msra.mxu0 %v47
    %91 = vmatprep.subr.mxu0 0.0
    %92 = vmatpush1.msra.mxu0 %v46
    %93 = vmatprep.subr.mxu0 0.0
    %94 = vmatpush1.msra.mxu0 %v45
    %95 = vmatprep.subr.mxu0 0.0
    %96 = vmatpush2.msra.mxu0 0.0
    %97 = vmatprep.subr.mxu0 0.0
    %98 = vmatpush2.msra.mxu0 0.0
    %99 = vmatprep.subr.mxu0 0.0
    %100 = vmatpush2.msra.mxu0 0.0
    %101 = vmatprep.subr.mxu0 0.0
    %102 = vmatpush2.msra.mxu0 0.0
    %103 = vmatprep.subr.mxu0 0.0
    %104 = vmatpush2.msra.mxu0 0.0
    %105 = vmatprep.subr.mxu0 0.0
    %106 = vmatpush2.msra.mxu0 0.0
    %107 = vmatprep.subr.mxu0 0.0
    %108 = vmatpush2.msra.mxu0 0.0
    %109 = vmatprep.subr.mxu0 0.0
    %110 = vmatpush2.msra.mxu0 0.0
    %111 = vmatprep.subr.mxu0 0.0
    %112 = vmatpush2.msra.mxu0 0.0
    %113 = vmatprep.subr.mxu0 0.0
    %114 = vmatpush2.msra.mxu0 0.0
    %115 = vmatprep.subr.mxu0 0.0
    %116 = vmatpush2.msra.mxu0 0.0
    %117 = vmatprep.subr.mxu0 0.0
    %118 = vmatpush2.msra.mxu0 0.0
    %119 = vmatprep.subr.mxu0 0.0
    %120 = vmatpush2.msra.mxu0 0.0
    %121 = vmatprep.subr.mxu0 0.0
    %122 = vmatpush2.msra.mxu0 0.0
    %123 = vmatprep.subr.mxu0 0.0
    %124 = vmatpush2.msra.mxu0 0.0
    %125 = vmatprep.subr.mxu0 0.0
    %126 = vmatpush2.msra.mxu0 0.0
    %127 = vmatprep.mubr.f32.mxu0 0.0
    %128 = vmatmul.mubr.f32.gmra.mxu0 %v58
    %v129 = vpop.f32.mrf.mxu0
    %v130 = vadd.f32 %v54, %v129
    %v131 = vpop.f32.mrf.mxu0
    %132 = vmatprep.mubr.f32.mxu0 0.0
    %133 = vmatmul.mubr.f32.gmra.mxu0 %v61
    %v134 = vpop.f32.mrf.mxu0
    %v135 = vadd.f32 %v54, %v134
    %v136 = vpop.f32.mrf.mxu0
    %137 = vdwg.mxu0
    %138 = vst [vmem:[#allocation7] sm:$0xff] %v130
    %139 = vst [vmem:[#allocation7 + $0x8] sm:$0xff] %v135
    // Predicated region
    $region22: #{tpu_custom_call.1} parent=1 // pred_check
      _
    $region23: #{tpu_custom_call.1} parent=1 // pred_check_branch
      %141 = sbr.rel (0) target = $region25
    $region24: #{tpu_custom_call.1} parent=1 // pred_region
      %s143 = ssub.s32 256, 256
      %144 = vsyncadd [#allocation4], %s143
      %s145 = sshll.u32 [#allocation7], 4
      %s146 = int_to_ptr.vmem [resolvable:$true] %s145
      %151 = dma.vmem_to_hbm [thread:$0]  %s146, 256, %s3, [#allocation4], 128, 128, 8
    $region25: #{tpu_custom_call.1} parent=1 // pred_fallthru
      _
    // Predicated region
    $region26: #{tpu_custom_call.1} parent=1 // pred_check
      _
    $region27: #{tpu_custom_call.1} parent=1 // pred_check_branch
      %153 = sbr.rel (0) target = $region29
    $region28: #{tpu_custom_call.1} parent=1 // pred_region
      %154 = dma.done [#allocation4], 256
    $region29: #{tpu_custom_call.1} parent=1 // pred_fallthru
      _
    %155 = vsyncpa [#allocation3], 1
    %156 = vsyncpa [#allocation6], 1
    %157 = vsyncpa [#allocation4], 1

</llo_original>
